<compile_context>
chip_gen: v5e
topology: v5e:2x2
jax: 0.10.0
libtpu: 0.0.40
codegen_flags: <defaults>
</compile_context>

<pallas_src>
import jax
import jax.numpy as jnp
from jax.experimental import pallas as pl
from jax.experimental.pallas import tpu as pltpu

DIMS = 66                      # 22 atoms * 3 coordinates
IN_PAD = 128                   # lane-dense padded input width
HIDDEN = (128, 256, 256, 256, 128)
OUT_FORCE = 22 * 3             # force=True  -> output_dim = 66
OUT_ENERGY = 1                 # force=False -> output_dim = 1
OUT_PAD = 128                  # lane-dense padded output width


# ---------------------------------------------------------------------------
# Kernel helpers / bodies
# ---------------------------------------------------------------------------
def _layer(a_cd, w_ref, b_ref):
    """Linear+ReLU: MXU dot (operand already in weight dtype, f32 accumulate),
    bias add + ReLU in f32."""
    z = jnp.dot(a_cd, w_ref[...], preferred_element_type=jnp.float32) + b_ref[...]
    return jnp.maximum(z, 0.0)


def mlp_force_kernel(x_ref, w1, b1, w2, b2, w3, b3, w4, b4, w5, b5, w6, b6,
                     out_ref):
    """force=True branch: plain ReLU MLP; input/output padded to 128 lanes."""
    cd = w1.dtype
    a = _layer(x_ref[...].astype(cd), w1, b1).astype(cd)
    a = _layer(a, w2, b2).astype(cd)
    a = _layer(a, w3, b3).astype(cd)
    a = _layer(a, w4, b4).astype(cd)
    a = _layer(a, w5, b5).astype(cd)
    out_ref[...] = jnp.dot(a, w6[...], preferred_element_type=jnp.float32) + b6[...]


def mlp_energy_kernel(x_ref, w1, b1, w2, b2, w3, b3, w4, b4, w5, b5,
                      gseed, w5t, w4t, w3t, w2t, w1t, out_ref):
    """force=False branch: energy + analytic -d(energy)/dx * 10.

    Single lane-dense output block: grad in lanes 0..65, energy in lane DIMS."""
    cd = w1.dtype

    def bdot(g, wt_ref):
        return jnp.dot(g.astype(cd), wt_ref[...], preferred_element_type=jnp.float32)

    # Forward; keep only the narrow (cd) activations live for the backward masks.
    h1 = _layer(x_ref[...].astype(cd), w1, b1).astype(cd)
    h2 = _layer(h1, w2, b2).astype(cd)
    h3 = _layer(h2, w3, b3).astype(cd)
    h4 = _layer(h3, w4, b4).astype(cd)
    h5f = _layer(h4, w5, b5)                            # f32 for the energy reduce

    g6 = gseed[...]                                     # (1, 128) f32 row == w6
    # energy = h5 @ w6 (no bias): VPU mul + lane reduce instead of an N=1 MXU matmul.
    energy = jnp.sum(h5f * g6, axis=-1, keepdims=True)  # (TB, 1) f32

    # Analytic backward of sum(energy) w.r.t. x (replaces torch.autograd.grad).
    # ReLU masks reuse h_k > 0 (== z_k > 0); backward weights are pre-transposed.
    g = jnp.where(h5f > 0, g6, 0.0)                     # de/dz5
    g = jnp.where(h4 > 0, bdot(g, w5t), 0.0)
    g = jnp.where(h3 > 0, bdot(g, w4t), 0.0)
    g = jnp.where(h2 > 0, bdot(g, w3t), 0.0)
    g = jnp.where(h1 > 0, bdot(g, w2t), 0.0)
    grad = bdot(g, w1t) * (-10.0)                       # (TB, OUT_PAD); lanes>=DIMS are 0

    # Pack the energy into lane DIMS of the (otherwise zero) padded lanes.
    lane = jax.lax.broadcasted_iota(jnp.int32, (1, OUT_PAD), 1)
    out_ref[...] = grad + energy * (lane == DIMS).astype(jnp.float32)


# ---------------------------------------------------------------------------
# Wrapper / glue
# ---------------------------------------------------------------------------
def _round_up(x, m):
    return ((x + m - 1) // m) * m


def _pick_tiling():
    """Generation-aware defaults.

    v7x: 64 MiB physical VMEM  -> TB=2048 under a 48 MiB scoped limit.
    v5e/v6e: 128 MiB VMEM      -> TB=4096 under a 96 MiB scoped limit.
    """
    tb, lim = 2048, 48 * 1024 * 1024
    try:
        vmem = int(pltpu.get_tpu_info().vmem_capacity_bytes)
        if vmem >= 100 * 1024 * 1024:
            tb, lim = 4096, 96 * 1024 * 1024
    except Exception:
        pass
    return tb, lim


def _choose_tb(batch, block_b):
    """Tile height: <= block_b, multiple of 8 sublanes, and (when possible) an
    even number of >= 2 grid steps so both v7x TensorCores get work."""
    block_b = max(8, _round_up(block_b, 8))
    if batch <= 8:
        return 8
    ntiles = max(2, -(-batch // block_b))
    if ntiles % 2:
        ntiles += 1
    tb = _round_up(-(-batch // ntiles), 8)
    return min(block_b, max(8, tb))


def nn_policy_forward(x_in, t, params, *, force=True, block_b=None,
                      compute_dtype=jnp.bfloat16, vmem_limit_bytes=None):
    """Pallas implementation of NNPolicy.forward (vel_given=True). `t` unused."""
    del t  # the PyTorch forward ignores `t` as well

    auto_tb, auto_lim = _pick_tiling()
    block_b = auto_tb if block_b is None else block_b
    vmem_limit_bytes = auto_lim if vmem_limit_bytes is None else vmem_limit_bytes

    B = x_in.shape[0]
    TB = _choose_tb(B, block_b)
    B_pad = _round_up(B, TB)
    grid = (B_pad // TB,)

    # Positions only (drop the velocity half) and zero-pad features 66 -> 128 so
    # every input tile is lane-dense (weight rows 66..127 are zero, so no effect).
    x = x_in[:, :DIMS].astype(jnp.float32)
    x = jnp.pad(x, ((0, B_pad - B), (0, IN_PAD - DIMS)))

    ws = [jnp.asarray(w, jnp.float32) for w, _ in params]
    bs = [None if b is None else jnp.asarray(b, jnp.float32).reshape(1, -1)
          for _, b in params]
    cd = compute_dtype

    w1p = jnp.zeros((IN_PAD, HIDDEN[0]), jnp.float32).at[:DIMS, :].set(ws[0])

    def row_spec(feat):
        return pl.BlockSpec((TB, feat), lambda i: (i, 0))

    def const_spec(arr):                               # VMEM-resident across tiles
        return pl.BlockSpec(arr.shape, lambda i: (0, 0))

    cp = pltpu.CompilerParams(dimension_semantics=("parallel",),
                              vmem_limit_bytes=vmem_limit_bytes)

    if force:
        w6p = jnp.zeros((HIDDEN[-1], OUT_PAD), jnp.float32).at[:, :OUT_FORCE].set(ws[5])
        b6p = jnp.zeros((1, OUT_PAD), jnp.float32).at[:, :OUT_FORCE].set(bs[5])
        ops = [x,
               w1p.astype(cd), bs[0], ws[1].astype(cd), bs[1],
               ws[2].astype(cd), bs[2], ws[3].astype(cd), bs[3],
               ws[4].astype(cd), bs[4], w6p.astype(cd), b6p]
        flops = 2 * B_pad * (IN_PAD * 128 + 128 * 256 + 256 * 256 * 2
                             + 256 * 128 + 128 * OUT_PAD)
        nbytes = sum(int(o.size) * o.dtype.itemsize for o in ops) \
            + B_pad * OUT_PAD * 4
        out = pl.pallas_call(
            mlp_force_kernel,
            grid=grid,
            out_shape=jax.ShapeDtypeStruct((B_pad, OUT_PAD), jnp.float32),
            in_specs=[row_spec(IN_PAD)] + [const_spec(o) for o in ops[1:]],
            out_specs=row_spec(OUT_PAD),
            compiler_params=cp,
            cost_estimate=pl.CostEstimate(flops=flops, transcendentals=0,
                                          bytes_accessed=nbytes),
        )(*ops)
        return out[:B, :OUT_FORCE]

    # force=False: energy + gradient branch (single packed lane-dense output)
    gseed = ws[5].reshape(1, HIDDEN[-1])               # w6 as an f32 row (1,128)
    w1tp = jnp.zeros((HIDDEN[0], OUT_PAD), jnp.float32).at[:, :DIMS].set(ws[0].T)
    ops = [x,
           w1p.astype(cd), bs[0], ws[1].astype(cd), bs[1],
           ws[2].astype(cd), bs[2], ws[3].astype(cd), bs[3],
           ws[4].astype(cd), bs[4],
           gseed,
           ws[4].T.astype(cd), ws[3].T.astype(cd), ws[2].T.astype(cd),
           ws[1].T.astype(cd), w1tp.astype(cd)]
    fwd = IN_PAD * 128 + 128 * 256 + 256 * 256 * 2 + 256 * 128 + 128
    bwd = 128 * 256 + 256 * 256 * 2 + 256 * 128 + 128 * OUT_PAD
    flops = 2 * B_pad * (fwd + bwd)
    nbytes = sum(int(o.size) * o.dtype.itemsize for o in ops) + B_pad * OUT_PAD * 4
    out = pl.pallas_call(
        mlp_energy_kernel,
        grid=grid,
        out_shape=jax.ShapeDtypeStruct((B_pad, OUT_PAD), jnp.float32),
        in_specs=[row_spec(IN_PAD)] + [const_spec(o) for o in ops[1:]],
        out_specs=row_spec(OUT_PAD),
        compiler_params=cp,
        cost_estimate=pl.CostEstimate(flops=flops, transcendentals=0,
                                      bytes_accessed=nbytes),
    )(*ops)
    energy = out[:B, DIMS:DIMS + 1]                    # packed into lane DIMS
    grad = out[:B, :OUT_FORCE]
    return energy, grad


def init_params(key, *, force=True):
    """Deterministic PyTorch-style uniform(-1/sqrt(fan_in), 1/sqrt(fan_in)) init."""
    sizes = [DIMS] + list(HIDDEN) + [OUT_FORCE if force else OUT_ENERGY]
    params = []
    for i in range(len(sizes) - 1):
        fan_in, fan_out = sizes[i], sizes[i + 1]
        key, kw, kb = jax.random.split(key, 3)
        bound = 1.0 / float(fan_in) ** 0.5
        w = jax.random.uniform(kw, (fan_in, fan_out), jnp.float32, -bound, bound)
        last = i == len(sizes) - 2
        if last and not force:
            b = None                                   # bias=False on last layer
        else:
            b = jax.random.uniform(kb, (1, fan_out), jnp.float32, -bound, bound)
        params.append((w, b))
    return params


# ---------------------------------------------------------------------------
# Pure-JAX references (numerical verification only)
# ---------------------------------------------------------------------------
def _net_f32(xp, params):
    h = xp
    for i, (w, b) in enumerate(params):
        h = h @ w + (b if b is not None else 0.0)
        if i < len(params) - 1:
            h = jnp.maximum(h, 0.0)
    return h


def reference(x66, params, force, compute_dtype):
    """Mirrors the kernel's precision path (cast matmul operands / masks to
    compute_dtype; energy dot and all accumulation in f32)."""
    def c(a):
        return a.astype(compute_dtype).astype(jnp.float32)

    ws = [w for w, _ in params]
    bs = [b for _, b in params]
    h = x66
    hs = []
    for i in range(5):
        z = c(h) @ c(ws[i]) + bs[i]
        h = jnp.maximum(z, 0.0)
        hs.append(h)
    if force:
        return c(h) @ c(ws[5]) + bs[5]
    out = h @ ws[5]                                    # f32 energy (matches kernel)
    g = jnp.where(hs[4] > 0, ws[5].reshape(1, -1), 0.0)
    g = jnp.where(c(hs[3]) > 0, c(g) @ c(ws[4].T), 0.0)
    g = jnp.where(c(hs[2]) > 0, c(g) @ c(ws[3].T), 0.0)
    g = jnp.where(c(hs[1]) > 0, c(g) @ c(ws[2].T), 0.0)
    g = jnp.where(c(hs[0]) > 0, c(g) @ c(ws[1].T), 0.0)
    g = c(g) @ c(ws[0].T)
    return out, -10.0 * g


# ---------------------------------------------------------------------------
if __name__ == "__main__":
    B = 8
    key = jax.random.PRNGKey(0)
    key, kx = jax.random.split(key)
    # x_in: (batch, 2*dims) = positions (66) ++ velocities (66)
    x_in = jax.random.normal(kx, (B, 2 * DIMS), dtype=jnp.float32)
    t = jnp.zeros((B, 1), dtype=jnp.float32)           # ignored by forward
    x66 = x_in[:, :DIMS]

    params_force = init_params(jax.random.PRNGKey(1), force=True)
    params_energy = init_params(jax.random.PRNGKey(2), force=False)

    # --- f32 compute path (exact PyTorch semantics) -------------------------
    out_f = nn_policy_forward(x_in, t, params_force, force=True,
                              compute_dtype=jnp.float32)
    jax.block_until_ready(out_f)
    assert out_f.shape == (B, OUT_FORCE)
    assert jnp.allclose(out_f, reference(x66, params_force, True, jnp.float32),
                        atol=1e-4, rtol=1e-4)

    e_f, g_f = nn_policy_forward(x_in, t, params_energy, force=False,
                                 compute_dtype=jnp.float32)
    jax.block_until_ready((e_f, g_f))
    ref_e, ref_g = reference(x66, params_energy, False, jnp.float32)
    assert e_f.shape == (B, OUT_ENERGY) and g_f.shape == (B, OUT_FORCE)
    assert jnp.allclose(e_f, ref_e, atol=1e-4, rtol=1e-4)
    assert jnp.allclose(g_f, ref_g, atol=1e-3, rtol=1e-3)
    # cross-check the analytic backward against autograd (f32)
    auto_g = -10.0 * jax.grad(
        lambda xp: jnp.sum(_net_f32(xp, params_energy)))(x66)
    assert jnp.allclose(g_f, auto_g, atol=1e-3, rtol=1e-3)

    # --- bf16 compute path (default, MXU-friendly) --------------------------
    out_b = nn_policy_forward(x_in, t, params_force, force=True)
    jax.block_until_ready(out_b)
    assert jnp.allclose(out_b, reference(x66, params_force, True, jnp.bfloat16),
                        atol=2e-2, rtol=2e-2)

    e_b, g_b = nn_policy_forward(x_in, t, params_energy, force=False)
    jax.block_until_ready((e_b, g_b))
    ref_eb, ref_gb = reference(x66, params_energy, False, jnp.bfloat16)
    assert jnp.allclose(e_b, ref_eb, atol=2e-2, rtol=2e-2)
    assert jnp.allclose(g_b, ref_gb, atol=3e-2, rtol=3e-2)

    # --- multi-tile grid + batch padding exercise ---------------------------
    B2 = 40
    x2 = jax.random.normal(jax.random.PRNGKey(3), (B2, 2 * DIMS), jnp.float32)
    out2 = nn_policy_forward(x2, None, params_force, force=True,
                             block_b=16, compute_dtype=jnp.float32)
    jax.block_until_ready(out2)
    assert out2.shape == (B2, OUT_FORCE)
    assert jnp.allclose(out2, reference(x2[:, :DIMS], params_force, True,
                                        jnp.float32), atol=1e-4, rtol=1e-4)

    # --- large-tile path (exercises the generation-default TB and VMEM limit) ---
    B3 = 8192
    x3 = jax.random.normal(jax.random.PRNGKey(4), (B3, 2 * DIMS), jnp.float32)
    out3 = nn_policy_forward(x3, None, params_force, force=True,
                             compute_dtype=jnp.float32)
    jax.block_until_ready(out3)
    assert out3.shape == (B3, OUT_FORCE)
    assert jnp.allclose(out3, reference(x3[:, :DIMS], params_force, True,
                                        jnp.float32), atol=2e-3, rtol=2e-3)

    e3, g3 = nn_policy_forward(x3, None, params_energy, force=False,
                               compute_dtype=jnp.float32)
    jax.block_until_ready((e3, g3))
    ref_e3, ref_g3 = reference(x3[:, :DIMS], params_energy, False, jnp.float32)
    assert e3.shape == (B3, OUT_ENERGY) and g3.shape == (B3, OUT_FORCE)
    assert jnp.allclose(e3, ref_e3, atol=2e-3, rtol=2e-3)
    assert jnp.allclose(g3, ref_g3, atol=5e-3, rtol=5e-3)

    print("KERNEL_OK")
</pallas_src>

<mosaic_0001>
module attributes {stable_mosaic.version = 11 : i64} {
  func.func @mlp_force_kernel(%arg0: i32, %arg1: memref<8x128xf32, #tpu.memory_space<vmem>>, %arg2: memref<128x128xf32, #tpu.memory_space<vmem>>, %arg3: memref<1x128xf32, #tpu.memory_space<vmem>>, %arg4: memref<128x256xf32, #tpu.memory_space<vmem>>, %arg5: memref<1x256xf32, #tpu.memory_space<vmem>>, %arg6: memref<256x256xf32, #tpu.memory_space<vmem>>, %arg7: memref<1x256xf32, #tpu.memory_space<vmem>>, %arg8: memref<256x256xf32, #tpu.memory_space<vmem>>, %arg9: memref<1x256xf32, #tpu.memory_space<vmem>>, %arg10: memref<256x128xf32, #tpu.memory_space<vmem>>, %arg11: memref<1x128xf32, #tpu.memory_space<vmem>>, %arg12: memref<128x128xf32, #tpu.memory_space<vmem>>, %arg13: memref<1x128xf32, #tpu.memory_space<vmem>>, %arg14: memref<8x128xf32, #tpu.memory_space<vmem>>) attributes {dimension_semantics = [#tpu.dimension_semantics<parallel>], iteration_bounds = array<i64: 1>, scalar_prefetch = 0 : i64, scratch_operands = 0 : i64, tpu.core_type = #tpu.core_type<tc>, window_params = [{transform_indices = @transform_0, window_bounds = array<i64: 8, 128>}, {pipeline_mode = #tpu.pipeline_mode<synchronous>, transform_indices = @transform_1, window_bounds = array<i64: 128, 128>}, {pipeline_mode = #tpu.pipeline_mode<synchronous>, transform_indices = @transform_2, window_bounds = array<i64: 1, 128>}, {pipeline_mode = #tpu.pipeline_mode<synchronous>, transform_indices = @transform_3, window_bounds = array<i64: 128, 256>}, {pipeline_mode = #tpu.pipeline_mode<synchronous>, transform_indices = @transform_4, window_bounds = array<i64: 1, 256>}, {pipeline_mode = #tpu.pipeline_mode<synchronous>, transform_indices = @transform_5, window_bounds = array<i64: 256, 256>}, {pipeline_mode = #tpu.pipeline_mode<synchronous>, transform_indices = @transform_6, window_bounds = array<i64: 1, 256>}, {pipeline_mode = #tpu.pipeline_mode<synchronous>, transform_indices = @transform_7, window_bounds = array<i64: 256, 256>}, {pipeline_mode = #tpu.pipeline_mode<synchronous>, transform_indices = @transform_8, window_bounds = array<i64: 1, 256>}, {pipeline_mode = #tpu.pipeline_mode<synchronous>, transform_indices = @transform_9, window_bounds = array<i64: 256, 128>}, {pipeline_mode = #tpu.pipeline_mode<synchronous>, transform_indices = @transform_10, window_bounds = array<i64: 1, 128>}, {pipeline_mode = #tpu.pipeline_mode<synchronous>, transform_indices = @transform_11, window_bounds = array<i64: 128, 128>}, {pipeline_mode = #tpu.pipeline_mode<synchronous>, transform_indices = @transform_12, window_bounds = array<i64: 1, 128>}, {transform_indices = @transform_13, window_bounds = array<i64: 8, 128>}]} {
    %c0 = arith.constant 0 : index
    %c0_0 = arith.constant 0 : index
    %0 = vector.load %arg1[%c0, %c0_0] : memref<8x128xf32, #tpu.memory_space<vmem>>, vector<8x128xf32>
    %c0_1 = arith.constant 0 : index
    %c0_2 = arith.constant 0 : index
    %1 = vector.load %arg2[%c0_1, %c0_2] : memref<128x128xf32, #tpu.memory_space<vmem>>, vector<128x128xf32>
    %cst = arith.constant dense<0.000000e+00> : vector<8x128xf32>
    %2 = tpu.matmul %0, %1, %cst {dimension_numbers = #tpu.dot_dimension_numbers<[1], [0], [0], [1], [0, 0, 1, 1], [], []>} : vector<8x128xf32>, vector<128x128xf32>, vector<8x128xf32> -> vector<8x128xf32>
    %c0_3 = arith.constant 0 : index
    %c0_4 = arith.constant 0 : index
    %3 = vector.load %arg3[%c0_3, %c0_4] : memref<1x128xf32, #tpu.memory_space<vmem>>, vector<1x128xf32>
    %4 = vector.broadcast %3 : vector<1x128xf32> to vector<8x128xf32>
    %5 = arith.addf %2, %4 : vector<8x128xf32>
    %cst_5 = arith.constant 0.000000e+00 : f32
    %6 = vector.broadcast %cst_5 : f32 to vector<8x128xf32>
    %7 = arith.maximumf %5, %6 : vector<8x128xf32>
    %c0_6 = arith.constant 0 : index
    %c0_7 = arith.constant 0 : index
    %8 = vector.load %arg4[%c0_6, %c0_7] : memref<128x256xf32, #tpu.memory_space<vmem>>, vector<128x256xf32>
    %cst_8 = arith.constant dense<0.000000e+00> : vector<8x256xf32>
    %9 = tpu.matmul %7, %8, %cst_8 {dimension_numbers = #tpu.dot_dimension_numbers<[1], [0], [0], [1], [0, 0, 1, 1], [], []>} : vector<8x128xf32>, vector<128x256xf32>, vector<8x256xf32> -> vector<8x256xf32>
    %c0_9 = arith.constant 0 : index
    %c0_10 = arith.constant 0 : index
    %10 = vector.load %arg5[%c0_9, %c0_10] : memref<1x256xf32, #tpu.memory_space<vmem>>, vector<1x256xf32>
    %11 = vector.broadcast %10 : vector<1x256xf32> to vector<8x256xf32>
    %12 = arith.addf %9, %11 : vector<8x256xf32>
    %cst_11 = arith.constant 0.000000e+00 : f32
    %13 = vector.broadcast %cst_11 : f32 to vector<8x256xf32>
    %14 = arith.maximumf %12, %13 : vector<8x256xf32>
    %c0_12 = arith.constant 0 : index
    %c0_13 = arith.constant 0 : index
    %15 = vector.load %arg6[%c0_12, %c0_13] : memref<256x256xf32, #tpu.memory_space<vmem>>, vector<256x256xf32>
    %cst_14 = arith.constant dense<0.000000e+00> : vector<8x256xf32>
    %16 = tpu.matmul %14, %15, %cst_14 {dimension_numbers = #tpu.dot_dimension_numbers<[1], [0], [0], [1], [0, 0, 1, 1], [], []>} : vector<8x256xf32>, vector<256x256xf32>, vector<8x256xf32> -> vector<8x256xf32>
    %c0_15 = arith.constant 0 : index
    %c0_16 = arith.constant 0 : index
    %17 = vector.load %arg7[%c0_15, %c0_16] : memref<1x256xf32, #tpu.memory_space<vmem>>, vector<1x256xf32>
    %18 = vector.broadcast %17 : vector<1x256xf32> to vector<8x256xf32>
    %19 = arith.addf %16, %18 : vector<8x256xf32>
    %cst_17 = arith.constant 0.000000e+00 : f32
    %20 = vector.broadcast %cst_17 : f32 to vector<8x256xf32>
    %21 = arith.maximumf %19, %20 : vector<8x256xf32>
    %c0_18 = arith.constant 0 : index
    %c0_19 = arith.constant 0 : index
    %22 = vector.load %arg8[%c0_18, %c0_19] : memref<256x256xf32, #tpu.memory_space<vmem>>, vector<256x256xf32>
    %cst_20 = arith.constant dense<0.000000e+00> : vector<8x256xf32>
    %23 = tpu.matmul %21, %22, %cst_20 {dimension_numbers = #tpu.dot_dimension_numbers<[1], [0], [0], [1], [0, 0, 1, 1], [], []>} : vector<8x256xf32>, vector<256x256xf32>, vector<8x256xf32> -> vector<8x256xf32>
    %c0_21 = arith.constant 0 : index
    %c0_22 = arith.constant 0 : index
    %24 = vector.load %arg9[%c0_21, %c0_22] : memref<1x256xf32, #tpu.memory_space<vmem>>, vector<1x256xf32>
    %25 = vector.broadcast %24 : vector<1x256xf32> to vector<8x256xf32>
    %26 = arith.addf %23, %25 : vector<8x256xf32>
    %cst_23 = arith.constant 0.000000e+00 : f32
    %27 = vector.broadcast %cst_23 : f32 to vector<8x256xf32>
    %28 = arith.maximumf %26, %27 : vector<8x256xf32>
    %c0_24 = arith.constant 0 : index
    %c0_25 = arith.constant 0 : index
    %29 = vector.load %arg10[%c0_24, %c0_25] : memref<256x128xf32, #tpu.memory_space<vmem>>, vector<256x128xf32>
    %cst_26 = arith.constant dense<0.000000e+00> : vector<8x128xf32>
    %30 = tpu.matmul %28, %29, %cst_26 {dimension_numbers = #tpu.dot_dimension_numbers<[1], [0], [0], [1], [0, 0, 1, 1], [], []>} : vector<8x256xf32>, vector<256x128xf32>, vector<8x128xf32> -> vector<8x128xf32>
    %c0_27 = arith.constant 0 : index
    %c0_28 = arith.constant 0 : index
    %31 = vector.load %arg11[%c0_27, %c0_28] : memref<1x128xf32, #tpu.memory_space<vmem>>, vector<1x128xf32>
    %32 = vector.broadcast %31 : vector<1x128xf32> to vector<8x128xf32>
    %33 = arith.addf %30, %32 : vector<8x128xf32>
    %cst_29 = arith.constant 0.000000e+00 : f32
    %34 = vector.broadcast %cst_29 : f32 to vector<8x128xf32>
    %35 = arith.maximumf %33, %34 : vector<8x128xf32>
    %c0_30 = arith.constant 0 : index
    %c0_31 = arith.constant 0 : index
    %36 = vector.load %arg12[%c0_30, %c0_31] : memref<128x128xf32, #tpu.memory_space<vmem>>, vector<128x128xf32>
    %cst_32 = arith.constant dense<0.000000e+00> : vector<8x128xf32>
    %37 = tpu.matmul %35, %36, %cst_32 {dimension_numbers = #tpu.dot_dimension_numbers<[1], [0], [0], [1], [0, 0, 1, 1], [], []>} : vector<8x128xf32>, vector<128x128xf32>, vector<8x128xf32> -> vector<8x128xf32>
    %c0_33 = arith.constant 0 : index
    %c0_34 = arith.constant 0 : index
    %38 = vector.load %arg13[%c0_33, %c0_34] : memref<1x128xf32, #tpu.memory_space<vmem>>, vector<1x128xf32>
    %39 = vector.broadcast %38 : vector<1x128xf32> to vector<8x128xf32>
    %40 = arith.addf %37, %39 : vector<8x128xf32>
    %c0_35 = arith.constant 0 : index
    %c0_36 = arith.constant 0 : index
    %41 = vector.load %arg14[%c0_35, %c0_36] : memref<8x128xf32, #tpu.memory_space<vmem>>, vector<8x128xf32>
    tpu.vector_store %arg14[%c0_35, %c0_36], %40 {strides = array<i32>} : memref<8x128xf32, #tpu.memory_space<vmem>>, vector<8x128xf32>,
    return
  }
  func.func @transform_0(%arg0: i32) -> (i32, i32) {
    %c0_i32 = arith.constant 0 : i32
    %c0_i32_0 = arith.constant 0 : i32
    return %arg0, %c0_i32 : i32, i32
  }
  func.func @transform_1(%arg0: i32) -> (i32, i32) {
    %c0_i32 = arith.constant 0 : i32
    %c0_i32_0 = arith.constant 0 : i32
    %c0_i32_1 = arith.constant 0 : i32
    return %c0_i32, %c0_i32_0 : i32, i32
  }
  func.func @transform_2(%arg0: i32) -> (i32, i32) {
    %c0_i32 = arith.constant 0 : i32
    %c0_i32_0 = arith.constant 0 : i32
    %c0_i32_1 = arith.constant 0 : i32
    return %c0_i32, %c0_i32_0 : i32, i32
  }
  func.func @transform_3(%arg0: i32) -> (i32, i32) {
    %c0_i32 = arith.constant 0 : i32
    %c0_i32_0 = arith.constant 0 : i32
    %c0_i32_1 = arith.constant 0 : i32
    return %c0_i32, %c0_i32_0 : i32, i32
  }
  func.func @transform_4(%arg0: i32) -> (i32, i32) {
    %c0_i32 = arith.constant 0 : i32
    %c0_i32_0 = arith.constant 0 : i32
    %c0_i32_1 = arith.constant 0 : i32
    return %c0_i32, %c0_i32_0 : i32, i32
  }
  func.func @transform_5(%arg0: i32) -> (i32, i32) {
    %c0_i32 = arith.constant 0 : i32
    %c0_i32_0 = arith.constant 0 : i32
    %c0_i32_1 = arith.constant 0 : i32
    return %c0_i32, %c0_i32_0 : i32, i32
  }
  func.func @transform_6(%arg0: i32) -> (i32, i32) {
    %c0_i32 = arith.constant 0 : i32
    %c0_i32_0 = arith.constant 0 : i32
    %c0_i32_1 = arith.constant 0 : i32
    return %c0_i32, %c0_i32_0 : i32, i32
  }
  func.func @transform_7(%arg0: i32) -> (i32, i32) {
    %c0_i32 = arith.constant 0 : i32
    %c0_i32_0 = arith.constant 0 : i32
    %c0_i32_1 = arith.constant 0 : i32
    return %c0_i32, %c0_i32_0 : i32, i32
  }
  func.func @transform_8(%arg0: i32) -> (i32, i32) {
    %c0_i32 = arith.constant 0 : i32
    %c0_i32_0 = arith.constant 0 : i32
    %c0_i32_1 = arith.constant 0 : i32
    return %c0_i32, %c0_i32_0 : i32, i32
  }
  func.func @transform_9(%arg0: i32) -> (i32, i32) {
    %c0_i32 = arith.constant 0 : i32
    %c0_i32_0 = arith.constant 0 : i32
    %c0_i32_1 = arith.constant 0 : i32
    return %c0_i32, %c0_i32_0 : i32, i32
  }
  func.func @transform_10(%arg0: i32) -> (i32, i32) {
    %c0_i32 = arith.constant 0 : i32
    %c0_i32_0 = arith.constant 0 : i32
    %c0_i32_1 = arith.constant 0 : i32
    return %c0_i32, %c0_i32_0 : i32, i32
  }
  func.func @transform_11(%arg0: i32) -> (i32, i32) {
    %c0_i32 = arith.constant 0 : i32
    %c0_i32_0 = arith.constant 0 : i32
    %c0_i32_1 = arith.constant 0 : i32
    return %c0_i32, %c0_i32_0 : i32, i32
  }
  func.func @transform_12(%arg0: i32) -> (i32, i32) {
    %c0_i32 = arith.constant 0 : i32
    %c0_i32_0 = arith.constant 0 : i32
    %c0_i32_1 = arith.constant 0 : i32
    return %c0_i32, %c0_i32_0 : i32, i32
  }
  func.func @transform_13(%arg0: i32) -> (i32, i32) {
    %c0_i32 = arith.constant 0 : i32
    %c0_i32_0 = arith.constant 0 : i32
    return %arg0, %c0_i32 : i32, i32
  }
}

</mosaic_0001>

<llo_original>
// kernel: tpu_custom_call.1
$region0: #{tpu_custom_call.1}
  #allocation0 [shape = 'u32[]', space=smem, size = 0x4, offset = 0x4, fixed_abs, tag = 'smem constant byte address 0x4 - core index']
  #allocation1 [shape = 'u32[72,128]{1,0:T(1,128)}', space=vmem, size = 0x9000, scoped, tag = 'internal scratch']
  %s0 = inlined_call_operand.hbm [shape: f32[8,128], index: 0, kind: input, shape index: {}]
  %s1 = inlined_call_operand.hbm [shape: f32[128,128], index: 1, kind: input, shape index: {}]
  %s2 = inlined_call_operand.hbm [shape: f32[1,128], index: 2, kind: input, shape index: {}]
  %s3 = inlined_call_operand.hbm [shape: f32[128,256], index: 3, kind: input, shape index: {}]
  %s4 = inlined_call_operand.vmem [shape: f32[1,256], index: 4, kind: input, shape index: {}]
  %s5 = inlined_call_operand.hbm [shape: f32[256,256], index: 5, kind: input, shape index: {}]
  %s6 = inlined_call_operand.vmem [shape: f32[1,256], index: 6, kind: input, shape index: {}]
  %s7 = inlined_call_operand.hbm [shape: f32[256,256], index: 7, kind: input, shape index: {}]
  %s8 = inlined_call_operand.vmem [shape: f32[1,256], index: 8, kind: input, shape index: {}]
  %s9 = inlined_call_operand.hbm [shape: f32[256,128], index: 9, kind: input, shape index: {}]
  %s10 = inlined_call_operand.vmem [shape: f32[1,128], index: 10, kind: input, shape index: {}]
  %s11 = inlined_call_operand.hbm [shape: f32[128,128], index: 11, kind: input, shape index: {}]
  %s12 = inlined_call_operand.vmem [shape: f32[1,128], index: 12, kind: input, shape index: {}]
  %s13 = inlined_call_operand.hbm [shape: f32[8,128], index: 13, kind: output, shape index: {}]
  %s14 = sld [smem:[#allocation0]]
  $region94: #{tpu_custom_call.1} parent=0
    _
  %s16 = ssub.s32 1, %s14
  %s17 = scalar_select 0, %s16, %s14
  $region1: #{tpu_custom_call.1} parent=0
    #allocation2 [shape = 'u8[4096]{0}', space=vmem, size = 0x1000, scoped, tag = 'input window, operand 0, single buffered']
    #allocation3 [shape = 's32[1]{0}', space=sflag, size = 0x4, scoped, tag = 'scoped memory for tpu_custom_call.1']
    #allocation4 [shape = 's32[1]{0}', space=sflag, size = 0x4, scoped, tag = 'scoped memory for tpu_custom_call.1']
    #allocation5 [shape = 'u8[65536]{0}', space=vmem, size = 0x10000, scoped, tag = 'input window, operand 1, single buffered']
    #allocation6 [shape = 's32[1]{0}', space=sflag, size = 0x4, scoped, tag = 'scoped memory for tpu_custom_call.1']
    #allocation7 [shape = 'u8[512]{0}', space=vmem, size = 0x400, scoped, tag = 'input window, operand 2, single buffered']
    #allocation8 [shape = 'u8[131072]{0}', space=vmem, size = 0x20000, scoped, tag = 'input window, operand 3, single buffered']
    #allocation9 [shape = 's32[1]{0}', space=sflag, size = 0x4, scoped, tag = 'scoped memory for tpu_custom_call.1']
    #allocation10 [shape = 'u8[262144]{0}', space=vmem, size = 0x40000, scoped, tag = 'input window, operand 5, single buffered']
    #allocation11 [shape = 'u8[262144]{0}', space=vmem, size = 0x40000, scoped, tag = 'input window, operand 7, single buffered']
    #allocation12 [shape = 's32[1]{0}', space=sflag, size = 0x4, scoped, tag = 'scoped memory for tpu_custom_call.1']
    #allocation13 [shape = 'u8[131072]{0}', space=vmem, size = 0x20000, scoped, tag = 'input window, operand 9, single buffered']
    #allocation14 [shape = 'u8[65536]{0}', space=vmem, size = 0x10000, scoped, tag = 'input window, operand 11, single buffered']
    #allocation15 [shape = 's32[1]{0}', space=sflag, size = 0x4, scoped, tag = 'scoped memory for tpu_custom_call.1']
    #allocation16 [shape = 'u8[4096]{0}', space=vmem, size = 0x1000, scoped, tag = 'output window, operand 0, single buffered']
    %18 = vsyncpa [#allocation3], 0
    %19 = vsyncpa [#allocation6], 0
    %20 = vsyncpa [#allocation9], 0
    %21 = vsyncpa [#allocation12], 0
    %22 = vsyncpa [#allocation15], 0
    %23 = vsyncpa [#allocation4], 0
    // Predicated region
    $region2: #{tpu_custom_call.1} parent=1 // pred_check
      _
    $region3: #{tpu_custom_call.1} parent=1 // pred_check_branch
      %25 = sbr.rel (0) target = $region5
    $region4: #{tpu_custom_call.1} parent=1 // pred_region
      %27 = vsyncadd [#allocation3], 0
      %s29 = sshll.u32 %s0, 4
      %s30 = int_to_ptr.hbm [resolvable:$true] %s29
      %s31 = sshll.u32 [#allocation2], 4
      %s32 = int_to_ptr.vmem [resolvable:$true] %s31
      %34 = dma.hbm_to_vmem [thread:$0]  %s30, 128, %s32, [#allocation3]
    $region5: #{tpu_custom_call.1} parent=1 // pred_fallthru
      _
    // Predicated region
    $region6: #{tpu_custom_call.1} parent=1 // pred_check
      _
    $region7: #{tpu_custom_call.1} parent=1 // pred_check_branch
      %36 = sbr.rel (0) target = $region9
    $region8: #{tpu_custom_call.1} parent=1 // pred_region
      %38 = vsyncadd [#allocation6], 0
      %s39 = sshll.u32 %s1, 4
      %s40 = int_to_ptr.hbm [resolvable:$true] %s39
      %s41 = sshll.u32 [#allocation5], 4
      %s42 = int_to_ptr.vmem [resolvable:$true] %s41
      %47 = dma.hbm_to_vmem [thread:$0]  %s40, 2048, %s42, [#allocation6], 128, 128, 8
    $region9: #{tpu_custom_call.1} parent=1 // pred_fallthru
      _
    // Predicated region
    $region10: #{tpu_custom_call.1} parent=1 // pred_check
      _
    $region11: #{tpu_custom_call.1} parent=1 // pred_check_branch
      %49 = sbr.rel (0) target = $region13
    $region12: #{tpu_custom_call.1} parent=1 // pred_region
      %51 = vsyncadd [#allocation6], 0
      %s53 = sshll.u32 %s2, 4
      %s54 = int_to_ptr.hbm [resolvable:$true] %s53
      %s55 = sshll.u32 [#allocation7], 4
      %s56 = int_to_ptr.vmem [resolvable:$true] %s55
      %58 = dma.hbm_to_vmem [thread:$0]  %s54, 16, %s56, [#allocation6]
    $region13: #{tpu_custom_call.1} parent=1 // pred_fallthru
      _
    // Predicated region
    $region14: #{tpu_custom_call.1} parent=1 // pred_check
      _
    $region15: #{tpu_custom_call.1} parent=1 // pred_check_branch
      %60 = sbr.rel (0) target = $region17
    $region16: #{tpu_custom_call.1} parent=1 // pred_region
      %62 = vsyncadd [#allocation9], 0
      %s63 = sshll.u32 %s3, 4
      %s64 = int_to_ptr.hbm [resolvable:$true] %s63
      %s65 = sshll.u32 [#allocation8], 4
      %s66 = int_to_ptr.vmem [resolvable:$true] %s65
      %71 = dma.hbm_to_vmem [thread:$0]  %s64, 4096, %s66, [#allocation9], 256, 256, 16
    $region17: #{tpu_custom_call.1} parent=1 // pred_fallthru
      _
    // Predicated region
    $region18: #{tpu_custom_call.1} parent=1 // pred_check
      _
    $region19: #{tpu_custom_call.1} parent=1 // pred_check_branch
      %73 = sbr.rel (0) target = $region21
    $region20: #{tpu_custom_call.1} parent=1 // pred_region
      _
    $region21: #{tpu_custom_call.1} parent=1 // pred_fallthru
      _
    // Predicated region
    $region22: #{tpu_custom_call.1} parent=1 // pred_check
      _
    $region23: #{tpu_custom_call.1} parent=1 // pred_check_branch
      %75 = sbr.rel (0) target = $region25
    $region24: #{tpu_custom_call.1} parent=1 // pred_region
      %77 = vsyncadd [#allocation9], 0
      %s78 = sshll.u32 %s5, 4
      %s79 = int_to_ptr.hbm [resolvable:$true] %s78
      %s80 = sshll.u32 [#allocation10], 4
      %s81 = int_to_ptr.vmem [resolvable:$true] %s80
      %86 = dma.hbm_to_vmem [thread:$0]  %s79, 8192, %s81, [#allocation9], 256, 256, 16
    $region25: #{tpu_custom_call.1} parent=1 // pred_fallthru
      _
    // Predicated region
    $region26: #{tpu_custom_call.1} parent=1 // pred_check
      _
    $region27: #{tpu_custom_call.1} parent=1 // pred_check_branch
      %88 = sbr.rel (0) target = $region29
    $region28: #{tpu_custom_call.1} parent=1 // pred_region
      _
    $region29: #{tpu_custom_call.1} parent=1 // pred_fallthru
      _
    // Predicated region
    $region30: #{tpu_custom_call.1} parent=1 // pred_check
      _
    $region31: #{tpu_custom_call.1} parent=1 // pred_check_branch
      %90 = sbr.rel (0) target = $region33
    $region32: #{tpu_custom_call.1} parent=1 // pred_region
      %92 = vsyncadd [#allocation12], 0
      %s93 = sshll.u32 %s7, 4
      %s94 = int_to_ptr.hbm [resolvable:$true] %s93
      %s95 = sshll.u32 [#allocation11], 4
      %s96 = int_to_ptr.vmem [resolvable:$true] %s95
      %101 = dma.hbm_to_vmem [thread:$0]  %s94, 8192, %s96, [#allocation12], 256, 256, 16
    $region33: #{tpu_custom_call.1} parent=1 // pred_fallthru
      _
    // Predicated region
    $region34: #{tpu_custom_call.1} parent=1 // pred_check
      _
    $region35: #{tpu_custom_call.1} parent=1 // pred_check_branch
      %103 = sbr.rel (0) target = $region37
    $region36: #{tpu_custom_call.1} parent=1 // pred_region
      _
    $region37: #{tpu_custom_call.1} parent=1 // pred_fallthru
      _
    // Predicated region
    $region38: #{tpu_custom_call.1} parent=1 // pred_check
      _
    $region39: #{tpu_custom_call.1} parent=1 // pred_check_branch
      %105 = sbr.rel (0) target = $region41
    $region40: #{tpu_custom_call.1} parent=1 // pred_region
      %107 = vsyncadd [#allocation12], 0
      %s108 = sshll.u32 %s9, 4
      %s109 = int_to_ptr.hbm [resolvable:$true] %s108
      %s110 = sshll.u32 [#allocation13], 4
      %s111 = int_to_ptr.vmem [resolvable:$true] %s110
      %116 = dma.hbm_to_vmem [thread:$0]  %s109, 4096, %s111, [#allocation12], 128, 128, 8
    $region41: #{tpu_custom_call.1} parent=1 // pred_fallthru
      _
    // Predicated region
    $region42: #{tpu_custom_call.1} parent=1 // pred_check
      _
    $region43: #{tpu_custom_call.1} parent=1 // pred_check_branch
      %118 = sbr.rel (0) target = $region45
    $region44: #{tpu_custom_call.1} parent=1 // pred_region
      _
    $region45: #{tpu_custom_call.1} parent=1 // pred_fallthru
      _
    // Predicated region
    $region46: #{tpu_custom_call.1} parent=1 // pred_check
      _
    $region47: #{tpu_custom_call.1} parent=1 // pred_check_branch
      %120 = sbr.rel (0) target = $region49
    $region48: #{tpu_custom_call.1} parent=1 // pred_region
      %122 = vsyncadd [#allocation15], 0
      %s123 = sshll.u32 %s11, 4
      %s124 = int_to_ptr.hbm [resolvable:$true] %s123
      %s125 = sshll.u32 [#allocation14], 4
      %s126 = int_to_ptr.vmem [resolvable:$true] %s125
      %131 = dma.hbm_to_vmem [thread:$0]  %s124, 2048, %s126, [#allocation15], 128, 128, 8
    $region49: #{tpu_custom_call.1} parent=1 // pred_fallthru
      _
    // Predicated region
    $region50: #{tpu_custom_call.1} parent=1 // pred_check
      _
    $region51: #{tpu_custom_call.1} parent=1 // pred_check_branch
      %133 = sbr.rel (0) target = $region53
    $region52: #{tpu_custom_call.1} parent=1 // pred_region
      _
    $region53: #{tpu_custom_call.1} parent=1 // pred_fallthru
      _
    // Predicated region
    $region54: #{tpu_custom_call.1} parent=1 // pred_check
      _
    $region55: #{tpu_custom_call.1} parent=1 // pred_check_branch
      %135 = sbr.rel (0) target = $region57
    $region56: #{tpu_custom_call.1} parent=1 // pred_region
      %137 = dma.done [#allocation3], 128
    $region57: #{tpu_custom_call.1} parent=1 // pred_fallthru
      _
    // Predicated region
    $region58: #{tpu_custom_call.1} parent=1 // pred_check
      _
    $region59: #{tpu_custom_call.1} parent=1 // pred_check_branch
      %139 = sbr.rel (0) target = $region61
    $region60: #{tpu_custom_call.1} parent=1 // pred_region
      %141 = dma.done [#allocation6], 2048
    $region61: #{tpu_custom_call.1} parent=1 // pred_fallthru
      _
    // Predicated region
    $region62: #{tpu_custom_call.1} parent=1 // pred_check
      _
    $region63: #{tpu_custom_call.1} parent=1 // pred_check_branch
      %143 = sbr.rel (0) target = $region65
    $region64: #{tpu_custom_call.1} parent=1 // pred_region
      %145 = dma.done [#allocation6], 16
    $region65: #{tpu_custom_call.1} parent=1 // pred_fallthru
      _
    // Predicated region
    $region66: #{tpu_custom_call.1} parent=1 // pred_check
      _
    $region67: #{tpu_custom_call.1} parent=1 // pred_check_branch
      %147 = sbr.rel (0) target = $region69
    $region68: #{tpu_custom_call.1} parent=1 // pred_region
      %149 = dma.done [#allocation9], 4096
    $region69: #{tpu_custom_call.1} parent=1 // pred_fallthru
      _
    // Predicated region
    $region70: #{tpu_custom_call.1} parent=1 // pred_check
      _
    $region71: #{tpu_custom_call.1} parent=1 // pred_check_branch
      %151 = sbr.rel (0) target = $region73
    $region72: #{tpu_custom_call.1} parent=1 // pred_region
      %153 = dma.done [#allocation9], 8192
    $region73: #{tpu_custom_call.1} parent=1 // pred_fallthru
      _
    // Predicated region
    $region74: #{tpu_custom_call.1} parent=1 // pred_check
      _
    $region75: #{tpu_custom_call.1} parent=1 // pred_check_branch
      %155 = sbr.rel (0) target = $region77
    $region76: #{tpu_custom_call.1} parent=1 // pred_region
      %157 = dma.done [#allocation12], 8192
    $region77: #{tpu_custom_call.1} parent=1 // pred_fallthru
      _
    // Predicated region
    $region78: #{tpu_custom_call.1} parent=1 // pred_check
      _
    $region79: #{tpu_custom_call.1} parent=1 // pred_check_branch
      %159 = sbr.rel (0) target = $region81
    $region80: #{tpu_custom_call.1} parent=1 // pred_region
      %161 = dma.done [#allocation12], 4096
    $region81: #{tpu_custom_call.1} parent=1 // pred_fallthru
      _
    // Predicated region
    $region82: #{tpu_custom_call.1} parent=1 // pred_check
      _
    $region83: #{tpu_custom_call.1} parent=1 // pred_check_branch
      %163 = sbr.rel (0) target = $region85
    $region84: #{tpu_custom_call.1} parent=1 // pred_region
      %165 = dma.done [#allocation15], 2048
    $region85: #{tpu_custom_call.1} parent=1 // pred_fallthru
      _
    %v166 = vld [vmem:[#allocation2] sm:$0xff]
    %v167 = vld [vmem:[#allocation5] sm:$0xff]
    %v168 = vld [vmem:[#allocation5 + $0x8] sm:$0xff]
    %v169 = vld [vmem:[#allocation5 + $0x10] sm:$0xff]
    %v170 = vld [vmem:[#allocation5 + $0x18] sm:$0xff]
    %v171 = vld [vmem:[#allocation5 + $0x20] sm:$0xff]
    %v172 = vld [vmem:[#allocation5 + $0x28] sm:$0xff]
    %v173 = vld [vmem:[#allocation5 + $0x30] sm:$0xff]
    %v174 = vld [vmem:[#allocation5 + $0x38] sm:$0xff]
    %v175 = vld [vmem:[#allocation5 + $0x40] sm:$0xff]
    %v176 = vld [vmem:[#allocation5 + $0x48] sm:$0xff]
    %v177 = vld [vmem:[#allocation5 + $0x50] sm:$0xff]
    %v178 = vld [vmem:[#allocation5 + $0x58] sm:$0xff]
    %v179 = vld [vmem:[#allocation5 + $0x60] sm:$0xff]
    %v180 = vld [vmem:[#allocation5 + $0x68] sm:$0xff]
    %v181 = vld [vmem:[#allocation5 + $0x70] sm:$0xff]
    %v182 = vld [vmem:[#allocation5 + $0x78] sm:$0xff]
    %v183 = vld [vmem:[#allocation7] sm:$0x1]
    %v185 = vperm.slane %v183, 0
    %187 = vmatpush.msra.mxu0 %v182
    %188 = vmatpush.msra.mxu0 %v181
    %189 = vmatpush.msra.mxu0 %v180
    %190 = vmatpush.msra.mxu0 %v179
    %191 = vmatpush.msra.mxu0 %v178
    %192 = vmatpush.msra.mxu0 %v177
    %193 = vmatpush.msra.mxu0 %v176
    %194 = vmatpush.msra.mxu0 %v175
    %195 = vmatpush.msra.mxu0 %v174
    %196 = vmatpush.msra.mxu0 %v173
    %197 = vmatpush.msra.mxu0 %v172
    %198 = vmatpush.msra.mxu0 %v171
    %199 = vmatpush.msra.mxu0 %v170
    %200 = vmatpush.msra.mxu0 %v169
    %201 = vmatpush.msra.mxu0 %v168
    %202 = vmatpush.msra.mxu0 %v167
    %203 = vmatmul.f32.gmra.mxu0 %v166
    %v204 = vpop.f32.mrf.mxu0
    %v205 = vadd.f32 %v185, %v204
    %206 = vdwg.mxu0
    %v207 = vmax.f32 %v205, 0.0
    %v208 = vld [vmem:[#allocation8] sm:$0xff]
    %v209 = vld [vmem:[#allocation8 + $0x8] sm:$0xff]
    %v210 = vld [vmem:[#allocation8 + $0x10] sm:$0xff]
    %v211 = vld [vmem:[#allocation8 + $0x18] sm:$0xff]
    %v212 = vld [vmem:[#allocation8 + $0x20] sm:$0xff]
    %v213 = vld [vmem:[#allocation8 + $0x28] sm:$0xff]
    %v214 = vld [vmem:[#allocation8 + $0x30] sm:$0xff]
    %v215 = vld [vmem:[#allocation8 + $0x38] sm:$0xff]
    %v216 = vld [vmem:[#allocation8 + $0x40] sm:$0xff]
    %v217 = vld [vmem:[#allocation8 + $0x48] sm:$0xff]
    %v218 = vld [vmem:[#allocation8 + $0x50] sm:$0xff]
    %v219 = vld [vmem:[#allocation8 + $0x58] sm:$0xff]
    %v220 = vld [vmem:[#allocation8 + $0x60] sm:$0xff]
    %v221 = vld [vmem:[#allocation8 + $0x68] sm:$0xff]
    %v222 = vld [vmem:[#allocation8 + $0x70] sm:$0xff]
    %v223 = vld [vmem:[#allocation8 + $0x78] sm:$0xff]
    %v224 = vld [vmem:[#allocation8 + $0x80] sm:$0xff]
    %v225 = vld [vmem:[#allocation8 + $0x88] sm:$0xff]
    %v226 = vld [vmem:[#allocation8 + $0x90] sm:$0xff]
    %v227 = vld [vmem:[#allocation8 + $0x98] sm:$0xff]
    %v228 = vld [vmem:[#allocation8 + $0xa0] sm:$0xff]
    %v229 = vld [vmem:[#allocation8 + $0xa8] sm:$0xff]
    %v230 = vld [vmem:[#allocation8 + $0xb0] sm:$0xff]
    %v231 = vld [vmem:[#allocation8 + $0xb8] sm:$0xff]
    %v232 = vld [vmem:[#allocation8 + $0xc0] sm:$0xff]
    %v233 = vld [vmem:[#allocation8 + $0xc8] sm:$0xff]
    %v234 = vld [vmem:[#allocation8 + $0xd0] sm:$0xff]
    %v235 = vld [vmem:[#allocation8 + $0xd8] sm:$0xff]
    %v236 = vld [vmem:[#allocation8 + $0xe0] sm:$0xff]
    %v237 = vld [vmem:[#allocation8 + $0xe8] sm:$0xff]
    %v238 = vld [vmem:[#allocation8 + $0xf0] sm:$0xff]
    %v239 = vld [vmem:[#allocation8 + $0xf8] sm:$0xff]
    %v240 = vld [vmem:[%s4] sm:$0x3]
    %v242 = vperm.slane %v240, 0
    %v243 = vperm.slane %v240, 1
    %246 = vmatpush.msra.mxu0 %v238
    %247 = vmatpush.msra.mxu0 %v236
    %248 = vmatpush.msra.mxu0 %v234
    %249 = vmatpush.msra.mxu0 %v232
    %250 = vmatpush.msra.mxu0 %v230
    %251 = vmatpush.msra.mxu0 %v228
    %252 = vmatpush.msra.mxu0 %v226
    %253 = vmatpush.msra.mxu0 %v224
    %254 = vmatpush.msra.mxu0 %v222
    %255 = vmatpush.msra.mxu0 %v220
    %256 = vmatpush.msra.mxu0 %v218
    %257 = vmatpush.msra.mxu0 %v216
    %258 = vmatpush.msra.mxu0 %v214
    %259 = vmatpush.msra.mxu0 %v212
    %260 = vmatpush.msra.mxu0 %v210
    %261 = vmatpush.msra.mxu0 %v208
    %262 = vmatmul.f32.gmra.mxu0 %v207
    %v263 = vpop.f32.mrf.mxu0
    %v264 = vadd.f32 %v242, %v263
    %265 = vdwg.mxu0
    %266 = vmatpush.msra.mxu0 %v239
    %267 = vmatpush.msra.mxu0 %v237
    %268 = vmatpush.msra.mxu0 %v235
    %269 = vmatpush.msra.mxu0 %v233
    %270 = vmatpush.msra.mxu0 %v231
    %271 = vmatpush.msra.mxu0 %v229
    %272 = vmatpush.msra.mxu0 %v227
    %273 = vmatpush.msra.mxu0 %v225
    %274 = vmatpush.msra.mxu0 %v223
    %275 = vmatpush.msra.mxu0 %v221
    %276 = vmatpush.msra.mxu0 %v219
    %277 = vmatpush.msra.mxu0 %v217
    %278 = vmatpush.msra.mxu0 %v215
    %279 = vmatpush.msra.mxu0 %v213
    %280 = vmatpush.msra.mxu0 %v211
    %281 = vmatpush.msra.mxu0 %v209
    %282 = vmatmul.f32.gmra.mxu0 %v207
    %v283 = vpop.f32.mrf.mxu0
    %v284 = vadd.f32 %v243, %v283
    %285 = vdwg.mxu0
    %v286 = vmax.f32 %v264, 0.0
    %v287 = vmax.f32 %v284, 0.0
    %v288 = vld [vmem:[#allocation10] sm:$0xff]
    %v289 = vld [vmem:[#allocation10 + $0x8] sm:$0xff]
    %v290 = vld [vmem:[#allocation10 + $0x10] sm:$0xff]
    %v291 = vld [vmem:[#allocation10 + $0x18] sm:$0xff]
    %v292 = vld [vmem:[#allocation10 + $0x20] sm:$0xff]
    %v293 = vld [vmem:[#allocation10 + $0x28] sm:$0xff]
    %v294 = vld [vmem:[#allocation10 + $0x30] sm:$0xff]
    %v295 = vld [vmem:[#allocation10 + $0x38] sm:$0xff]
    %v296 = vld [vmem:[#allocation10 + $0x40] sm:$0xff]
    %v297 = vld [vmem:[#allocation10 + $0x48] sm:$0xff]
    %v298 = vld [vmem:[#allocation10 + $0x50] sm:$0xff]
    %v299 = vld [vmem:[#allocation10 + $0x58] sm:$0xff]
    %v300 = vld [vmem:[#allocation10 + $0x60] sm:$0xff]
    %v301 = vld [vmem:[#allocation10 + $0x68] sm:$0xff]
    %v302 = vld [vmem:[#allocation10 + $0x70] sm:$0xff]
    %v303 = vld [vmem:[#allocation10 + $0x78] sm:$0xff]
    %v304 = vld [vmem:[#allocation10 + $0x80] sm:$0xff]
    %v305 = vld [vmem:[#allocation10 + $0x88] sm:$0xff]
    %v306 = vld [vmem:[#allocation10 + $0x90] sm:$0xff]
    %v307 = vld [vmem:[#allocation10 + $0x98] sm:$0xff]
    %v308 = vld [vmem:[#allocation10 + $0xa0] sm:$0xff]
    %v309 = vld [vmem:[#allocation10 + $0xa8] sm:$0xff]
    %v310 = vld [vmem:[#allocation10 + $0xb0] sm:$0xff]
    %v311 = vld [vmem:[#allocation10 + $0xb8] sm:$0xff]
    %v312 = vld [vmem:[#allocation10 + $0xc0] sm:$0xff]
    %v313 = vld [vmem:[#allocation10 + $0xc8] sm:$0xff]
    %v314 = vld [vmem:[#allocation10 + $0xd0] sm:$0xff]
    %v315 = vld [vmem:[#allocation10 + $0xd8] sm:$0xff]
    %v316 = vld [vmem:[#allocation10 + $0xe0] sm:$0xff]
    %v317 = vld [vmem:[#allocation10 + $0xe8] sm:$0xff]
    %v318 = vld [vmem:[#allocation10 + $0xf0] sm:$0xff]
    %v319 = vld [vmem:[#allocation10 + $0xf8] sm:$0xff]
    %v320 = vld [vmem:[#allocation10 + $0x100] sm:$0xff]
    %v321 = vld [vmem:[#allocation10 + $0x108] sm:$0xff]
    %v322 = vld [vmem:[#allocation10 + $0x110] sm:$0xff]
    %v323 = vld [vmem:[#allocation10 + $0x118] sm:$0xff]
    %v324 = vld [vmem:[#allocation10 + $0x120] sm:$0xff]
    %v325 = vld [vmem:[#allocation10 + $0x128] sm:$0xff]
    %v326 = vld [vmem:[#allocation10 + $0x130] sm:$0xff]
    %v327 = vld [vmem:[#allocation10 + $0x138] sm:$0xff]
    %v328 = vld [vmem:[#allocation10 + $0x140] sm:$0xff]
    %v329 = vld [vmem:[#allocation10 + $0x148] sm:$0xff]
    %v330 = vld [vmem:[#allocation10 + $0x150] sm:$0xff]
    %v331 = vld [vmem:[#allocation10 + $0x158] sm:$0xff]
    %v332 = vld [vmem:[#allocation10 + $0x160] sm:$0xff]
    %v333 = vld [vmem:[#allocation10 + $0x168] sm:$0xff]
    %v334 = vld [vmem:[#allocation10 + $0x170] sm:$0xff]
    %v335 = vld [vmem:[#allocation10 + $0x178] sm:$0xff]
    %v336 = vld [vmem:[#allocation10 + $0x180] sm:$0xff]
    %v337 = vld [vmem:[#allocation10 + $0x188] sm:$0xff]
    %v338 = vld [vmem:[#allocation10 + $0x190] sm:$0xff]
    %v339 = vld [vmem:[#allocation10 + $0x198] sm:$0xff]
    %v340 = vld [vmem:[#allocation10 + $0x1a0] sm:$0xff]
    %v341 = vld [vmem:[#allocation10 + $0x1a8] sm:$0xff]
    %v342 = vld [vmem:[#allocation10 + $0x1b0] sm:$0xff]
    %v343 = vld [vmem:[#allocation10 + $0x1b8] sm:$0xff]
    %v344 = vld [vmem:[#allocation10 + $0x1c0] sm:$0xff]
    %v345 = vld [vmem:[#allocation10 + $0x1c8] sm:$0xff]
    %v346 = vld [vmem:[#allocation10 + $0x1d0] sm:$0xff]
    %v347 = vld [vmem:[#allocation10 + $0x1d8] sm:$0xff]
    %v348 = vld [vmem:[#allocation10 + $0x1e0] sm:$0xff]
    %v349 = vld [vmem:[#allocation10 + $0x1e8] sm:$0xff]
    %v350 = vld [vmem:[#allocation10 + $0x1f0] sm:$0xff]
    %v351 = vld [vmem:[#allocation10 + $0x1f8] sm:$0xff]
    %v352 = vld [vmem:[%s6] sm:$0x3]
    %v354 = vperm.slane %v352, 0
    %v355 = vperm.slane %v352, 1
    %358 = vmatpush.msra.mxu0 %v318
    %359 = vmatpush.msra.mxu0 %v316
    %360 = vmatpush.msra.mxu0 %v314
    %361 = vmatpush.msra.mxu0 %v312
    %362 = vmatpush.msra.mxu0 %v310
    %363 = vmatpush.msra.mxu0 %v308
    %364 = vmatpush.msra.mxu0 %v306
    %365 = vmatpush.msra.mxu0 %v304
    %366 = vmatpush.msra.mxu0 %v302
    %367 = vmatpush.msra.mxu0 %v300
    %368 = vmatpush.msra.mxu0 %v298
    %369 = vmatpush.msra.mxu0 %v296
    %370 = vmatpush.msra.mxu0 %v294
    %371 = vmatpush.msra.mxu0 %v292
    %372 = vmatpush.msra.mxu0 %v290
    %373 = vmatpush.msra.mxu0 %v288
    %374 = vmatmul.f32.gmra.mxu0 %v286
    %v375 = vpop.f32.mrf.mxu0
    %v376 = vadd.f32 %v354, %v375
    %377 = vdwg.mxu0
    %378 = vmatpush.msra.mxu0 %v350
    %379 = vmatpush.msra.mxu0 %v348
    %380 = vmatpush.msra.mxu0 %v346
    %381 = vmatpush.msra.mxu0 %v344
    %382 = vmatpush.msra.mxu0 %v342
    %383 = vmatpush.msra.mxu0 %v340
    %384 = vmatpush.msra.mxu0 %v338
    %385 = vmatpush.msra.mxu0 %v336
    %386 = vmatpush.msra.mxu0 %v334
    %387 = vmatpush.msra.mxu0 %v332
    %388 = vmatpush.msra.mxu0 %v330
    %389 = vmatpush.msra.mxu0 %v328
    %390 = vmatpush.msra.mxu0 %v326
    %391 = vmatpush.msra.mxu0 %v324
    %392 = vmatpush.msra.mxu0 %v322
    %393 = vmatpush.msra.mxu0 %v320
    %394 = vmatmul.f32.gmra.mxu0 %v287
    %v395 = vpop.f32.mrf.mxu0
    %v396 = vadd.f32 %v376, %v395
    %397 = vdwg.mxu0
    %398 = vmatpush.msra.mxu0 %v319
    %399 = vmatpush.msra.mxu0 %v317
    %400 = vmatpush.msra.mxu0 %v315
    %401 = vmatpush.msra.mxu0 %v313
    %402 = vmatpush.msra.mxu0 %v311
    %403 = vmatpush.msra.mxu0 %v309
    %404 = vmatpush.msra.mxu0 %v307
    %405 = vmatpush.msra.mxu0 %v305
    %406 = vmatpush.msra.mxu0 %v303
    %407 = vmatpush.msra.mxu0 %v301
    %408 = vmatpush.msra.mxu0 %v299
    %409 = vmatpush.msra.mxu0 %v297
    %410 = vmatpush.msra.mxu0 %v295
    %411 = vmatpush.msra.mxu0 %v293
    %412 = vmatpush.msra.mxu0 %v291
    %413 = vmatpush.msra.mxu0 %v289
    %414 = vmatmul.f32.gmra.mxu0 %v286
    %v415 = vpop.f32.mrf.mxu0
    %v416 = vadd.f32 %v355, %v415
    %417 = vdwg.mxu0
    %418 = vmatpush.msra.mxu0 %v351
    %419 = vmatpush.msra.mxu0 %v349
    %420 = vmatpush.msra.mxu0 %v347
    %421 = vmatpush.msra.mxu0 %v345
    %422 = vmatpush.msra.mxu0 %v343
    %423 = vmatpush.msra.mxu0 %v341
    %424 = vmatpush.msra.mxu0 %v339
    %425 = vmatpush.msra.mxu0 %v337
    %426 = vmatpush.msra.mxu0 %v335
    %427 = vmatpush.msra.mxu0 %v333
    %428 = vmatpush.msra.mxu0 %v331
    %429 = vmatpush.msra.mxu0 %v329
    %430 = vmatpush.msra.mxu0 %v327
    %431 = vmatpush.msra.mxu0 %v325
    %432 = vmatpush.msra.mxu0 %v323
    %433 = vmatpush.msra.mxu0 %v321
    %434 = vmatmul.f32.gmra.mxu0 %v287
    %v435 = vpop.f32.mrf.mxu0
    %v436 = vadd.f32 %v416, %v435
    %437 = vdwg.mxu0
    %v438 = vmax.f32 %v396, 0.0
    %v439 = vmax.f32 %v436, 0.0
    %v440 = vld [vmem:[#allocation11] sm:$0xff]
    %v441 = vld [vmem:[#allocation11 + $0x8] sm:$0xff]
    %v442 = vld [vmem:[#allocation11 + $0x10] sm:$0xff]
    %v443 = vld [vmem:[#allocation11 + $0x18] sm:$0xff]
    %v444 = vld [vmem:[#allocation11 + $0x20] sm:$0xff]
    %v445 = vld [vmem:[#allocation11 + $0x28] sm:$0xff]
    %v446 = vld [vmem:[#allocation11 + $0x30] sm:$0xff]
    %v447 = vld [vmem:[#allocation11 + $0x38] sm:$0xff]
    %v448 = vld [vmem:[#allocation11 + $0x40] sm:$0xff]
    %v449 = vld [vmem:[#allocation11 + $0x48] sm:$0xff]
    %v450 = vld [vmem:[#allocation11 + $0x50] sm:$0xff]
    %v451 = vld [vmem:[#allocation11 + $0x58] sm:$0xff]
    %v452 = vld [vmem:[#allocation11 + $0x60] sm:$0xff]
    %v453 = vld [vmem:[#allocation11 + $0x68] sm:$0xff]
    %v454 = vld [vmem:[#allocation11 + $0x70] sm:$0xff]
    %v455 = vld [vmem:[#allocation11 + $0x78] sm:$0xff]
    %v456 = vld [vmem:[#allocation11 + $0x80] sm:$0xff]
    %v457 = vld [vmem:[#allocation11 + $0x88] sm:$0xff]
    %v458 = vld [vmem:[#allocation11 + $0x90] sm:$0xff]
    %v459 = vld [vmem:[#allocation11 + $0x98] sm:$0xff]
    %v460 = vld [vmem:[#allocation11 + $0xa0] sm:$0xff]
    %v461 = vld [vmem:[#allocation11 + $0xa8] sm:$0xff]
    %v462 = vld [vmem:[#allocation11 + $0xb0] sm:$0xff]
    %v463 = vld [vmem:[#allocation11 + $0xb8] sm:$0xff]
    %v464 = vld [vmem:[#allocation11 + $0xc0] sm:$0xff]
    %v465 = vld [vmem:[#allocation11 + $0xc8] sm:$0xff]
    %v466 = vld [vmem:[#allocation11 + $0xd0] sm:$0xff]
    %v467 = vld [vmem:[#allocation11 + $0xd8] sm:$0xff]
    %v468 = vld [vmem:[#allocation11 + $0xe0] sm:$0xff]
    %v469 = vld [vmem:[#allocation11 + $0xe8] sm:$0xff]
    %v470 = vld [vmem:[#allocation11 + $0xf0] sm:$0xff]
    %v471 = vld [vmem:[#allocation11 + $0xf8] sm:$0xff]
    %v472 = vld [vmem:[#allocation11 + $0x100] sm:$0xff]
    %v473 = vld [vmem:[#allocation11 + $0x108] sm:$0xff]
    %v474 = vld [vmem:[#allocation11 + $0x110] sm:$0xff]
    %v475 = vld [vmem:[#allocation11 + $0x118] sm:$0xff]
    %v476 = vld [vmem:[#allocation11 + $0x120] sm:$0xff]
    %v477 = vld [vmem:[#allocation11 + $0x128] sm:$0xff]
    %v478 = vld [vmem:[#allocation11 + $0x130] sm:$0xff]
    %v479 = vld [vmem:[#allocation11 + $0x138] sm:$0xff]
    %v480 = vld [vmem:[#allocation11 + $0x140] sm:$0xff]
    %v481 = vld [vmem:[#allocation11 + $0x148] sm:$0xff]
    %v482 = vld [vmem:[#allocation11 + $0x150] sm:$0xff]
    %v483 = vld [vmem:[#allocation11 + $0x158] sm:$0xff]
    %v484 = vld [vmem:[#allocation11 + $0x160] sm:$0xff]
    %v485 = vld [vmem:[#allocation11 + $0x168] sm:$0xff]
    %v486 = vld [vmem:[#allocation11 + $0x170] sm:$0xff]
    %v487 = vld [vmem:[#allocation11 + $0x178] sm:$0xff]
    %v488 = vld [vmem:[#allocation11 + $0x180] sm:$0xff]
    %v489 = vld [vmem:[#allocation11 + $0x188] sm:$0xff]
    %v490 = vld [vmem:[#allocation11 + $0x190] sm:$0xff]
    %v491 = vld [vmem:[#allocation11 + $0x198] sm:$0xff]
    %v492 = vld [vmem:[#allocation11 + $0x1a0] sm:$0xff]
    %v493 = vld [vmem:[#allocation11 + $0x1a8] sm:$0xff]
    %v494 = vld [vmem:[#allocation11 + $0x1b0] sm:$0xff]
    %v495 = vld [vmem:[#allocation11 + $0x1b8] sm:$0xff]
    %v496 = vld [vmem:[#allocation11 + $0x1c0] sm:$0xff]
    %v497 = vld [vmem:[#allocation11 + $0x1c8] sm:$0xff]
    %v498 = vld [vmem:[#allocation11 + $0x1d0] sm:$0xff]
    %v499 = vld [vmem:[#allocation11 + $0x1d8] sm:$0xff]
    %v500 = vld [vmem:[#allocation11 + $0x1e0] sm:$0xff]
    %v501 = vld [vmem:[#allocation11 + $0x1e8] sm:$0xff]
    %v502 = vld [vmem:[#allocation11 + $0x1f0] sm:$0xff]
    %v503 = vld [vmem:[#allocation11 + $0x1f8] sm:$0xff]
    %v504 = vld [vmem:[%s8] sm:$0x3]
    %v506 = vperm.slane %v504, 0
    %v507 = vperm.slane %v504, 1
    %510 = vmatpush.msra.mxu0 %v470
    %511 = vmatpush.msra.mxu0 %v468
    %512 = vmatpush.msra.mxu0 %v466
    %513 = vmatpush.msra.mxu0 %v464
    %514 = vmatpush.msra.mxu0 %v462
    %515 = vmatpush.msra.mxu0 %v460
    %516 = vmatpush.msra.mxu0 %v458
    %517 = vmatpush.msra.mxu0 %v456
    %518 = vmatpush.msra.mxu0 %v454
    %519 = vmatpush.msra.mxu0 %v452
    %520 = vmatpush.msra.mxu0 %v450
    %521 = vmatpush.msra.mxu0 %v448
    %522 = vmatpush.msra.mxu0 %v446
    %523 = vmatpush.msra.mxu0 %v444
    %524 = vmatpush.msra.mxu0 %v442
    %525 = vmatpush.msra.mxu0 %v440
    %526 = vmatmul.f32.gmra.mxu0 %v438
    %v527 = vpop.f32.mrf.mxu0
    %v528 = vadd.f32 %v506, %v527
    %529 = vdwg.mxu0
    %530 = vmatpush.msra.mxu0 %v502
    %531 = vmatpush.msra.mxu0 %v500
    %532 = vmatpush.msra.mxu0 %v498
    %533 = vmatpush.msra.mxu0 %v496
    %534 = vmatpush.msra.mxu0 %v494
    %535 = vmatpush.msra.mxu0 %v492
    %536 = vmatpush.msra.mxu0 %v490
    %537 = vmatpush.msra.mxu0 %v488
    %538 = vmatpush.msra.mxu0 %v486
    %539 = vmatpush.msra.mxu0 %v484
    %540 = vmatpush.msra.mxu0 %v482
    %541 = vmatpush.msra.mxu0 %v480
    %542 = vmatpush.msra.mxu0 %v478
    %543 = vmatpush.msra.mxu0 %v476
    %544 = vmatpush.msra.mxu0 %v474
    %545 = vmatpush.msra.mxu0 %v472
    %546 = vmatmul.f32.gmra.mxu0 %v439
    %v547 = vpop.f32.mrf.mxu0
    %v548 = vadd.f32 %v528, %v547
    %549 = vdwg.mxu0
    %550 = vmatpush.msra.mxu0 %v471
    %551 = vmatpush.msra.mxu0 %v469
    %552 = vmatpush.msra.mxu0 %v467
    %553 = vmatpush.msra.mxu0 %v465
    %554 = vmatpush.msra.mxu0 %v463
    %555 = vmatpush.msra.mxu0 %v461
    %556 = vmatpush.msra.mxu0 %v459
    %557 = vmatpush.msra.mxu0 %v457
    %558 = vmatpush.msra.mxu0 %v455
    %559 = vmatpush.msra.mxu0 %v453
    %560 = vmatpush.msra.mxu0 %v451
    %561 = vmatpush.msra.mxu0 %v449
    %562 = vmatpush.msra.mxu0 %v447
    %563 = vmatpush.msra.mxu0 %v445
    %564 = vmatpush.msra.mxu0 %v443
    %565 = vmatpush.msra.mxu0 %v441
    %566 = vmatmul.f32.gmra.mxu0 %v438
    %v567 = vpop.f32.mrf.mxu0
    %v568 = vadd.f32 %v507, %v567
    %569 = vdwg.mxu0
    %570 = vmatpush.msra.mxu0 %v503
    %571 = vmatpush.msra.mxu0 %v501
    %572 = vmatpush.msra.mxu0 %v499
    %573 = vmatpush.msra.mxu0 %v497
    %574 = vmatpush.msra.mxu0 %v495
    %575 = vmatpush.msra.mxu0 %v493
    %576 = vmatpush.msra.mxu0 %v491
    %577 = vmatpush.msra.mxu0 %v489
    %578 = vmatpush.msra.mxu0 %v487
    %579 = vmatpush.msra.mxu0 %v485
    %580 = vmatpush.msra.mxu0 %v483
    %581 = vmatpush.msra.mxu0 %v481
    %582 = vmatpush.msra.mxu0 %v479
    %583 = vmatpush.msra.mxu0 %v477
    %584 = vmatpush.msra.mxu0 %v475
    %585 = vmatpush.msra.mxu0 %v473
    %586 = vmatmul.f32.gmra.mxu0 %v439
    %v587 = vpop.f32.mrf.mxu0
    %v588 = vadd.f32 %v568, %v587
    %589 = vdwg.mxu0
    %v590 = vmax.f32 %v548, 0.0
    %v591 = vmax.f32 %v588, 0.0
    %v592 = vld [vmem:[#allocation13] sm:$0xff]
    %v593 = vld [vmem:[#allocation13 + $0x8] sm:$0xff]
    %v594 = vld [vmem:[#allocation13 + $0x10] sm:$0xff]
    %v595 = vld [vmem:[#allocation13 + $0x18] sm:$0xff]
    %v596 = vld [vmem:[#allocation13 + $0x20] sm:$0xff]
    %v597 = vld [vmem:[#allocation13 + $0x28] sm:$0xff]
    %v598 = vld [vmem:[#allocation13 + $0x30] sm:$0xff]
    %v599 = vld [vmem:[#allocation13 + $0x38] sm:$0xff]
    %v600 = vld [vmem:[#allocation13 + $0x40] sm:$0xff]
    %v601 = vld [vmem:[#allocation13 + $0x48] sm:$0xff]
    %v602 = vld [vmem:[#allocation13 + $0x50] sm:$0xff]
    %v603 = vld [vmem:[#allocation13 + $0x58] sm:$0xff]
    %v604 = vld [vmem:[#allocation13 + $0x60] sm:$0xff]
    %v605 = vld [vmem:[#allocation13 + $0x68] sm:$0xff]
    %v606 = vld [vmem:[#allocation13 + $0x70] sm:$0xff]
    %v607 = vld [vmem:[#allocation13 + $0x78] sm:$0xff]
    %v608 = vld [vmem:[#allocation13 + $0x80] sm:$0xff]
    %v609 = vld [vmem:[#allocation13 + $0x88] sm:$0xff]
    %v610 = vld [vmem:[#allocation13 + $0x90] sm:$0xff]
    %v611 = vld [vmem:[#allocation13 + $0x98] sm:$0xff]
    %v612 = vld [vmem:[#allocation13 + $0xa0] sm:$0xff]
    %v613 = vld [vmem:[#allocation13 + $0xa8] sm:$0xff]
    %v614 = vld [vmem:[#allocation13 + $0xb0] sm:$0xff]
    %v615 = vld [vmem:[#allocation13 + $0xb8] sm:$0xff]
    %v616 = vld [vmem:[#allocation13 + $0xc0] sm:$0xff]
    %v617 = vld [vmem:[#allocation13 + $0xc8] sm:$0xff]
    %v618 = vld [vmem:[#allocation13 + $0xd0] sm:$0xff]
    %v619 = vld [vmem:[#allocation13 + $0xd8] sm:$0xff]
    %v620 = vld [vmem:[#allocation13 + $0xe0] sm:$0xff]
    %v621 = vld [vmem:[#allocation13 + $0xe8] sm:$0xff]
    %v622 = vld [vmem:[#allocation13 + $0xf0] sm:$0xff]
    %v623 = vld [vmem:[#allocation13 + $0xf8] sm:$0xff]
    %v624 = vld [vmem:[%s10] sm:$0x1]
    %v626 = vperm.slane %v624, 0
    %628 = vmatpush.msra.mxu0 %v607
    %629 = vmatpush.msra.mxu0 %v606
    %630 = vmatpush.msra.mxu0 %v605
    %631 = vmatpush.msra.mxu0 %v604
    %632 = vmatpush.msra.mxu0 %v603
    %633 = vmatpush.msra.mxu0 %v602
    %634 = vmatpush.msra.mxu0 %v601
    %635 = vmatpush.msra.mxu0 %v600
    %636 = vmatpush.msra.mxu0 %v599
    %637 = vmatpush.msra.mxu0 %v598
    %638 = vmatpush.msra.mxu0 %v597
    %639 = vmatpush.msra.mxu0 %v596
    %640 = vmatpush.msra.mxu0 %v595
    %641 = vmatpush.msra.mxu0 %v594
    %642 = vmatpush.msra.mxu0 %v593
    %643 = vmatpush.msra.mxu0 %v592
    %644 = vmatmul.f32.gmra.mxu0 %v590
    %v645 = vpop.f32.mrf.mxu0
    %v646 = vadd.f32 %v626, %v645
    %647 = vdwg.mxu0
    %648 = vmatpush.msra.mxu0 %v623
    %649 = vmatpush.msra.mxu0 %v622
    %650 = vmatpush.msra.mxu0 %v621
    %651 = vmatpush.msra.mxu0 %v620
    %652 = vmatpush.msra.mxu0 %v619
    %653 = vmatpush.msra.mxu0 %v618
    %654 = vmatpush.msra.mxu0 %v617
    %655 = vmatpush.msra.mxu0 %v616
    %656 = vmatpush.msra.mxu0 %v615
    %657 = vmatpush.msra.mxu0 %v614
    %658 = vmatpush.msra.mxu0 %v613
    %659 = vmatpush.msra.mxu0 %v612
    %660 = vmatpush.msra.mxu0 %v611
    %661 = vmatpush.msra.mxu0 %v610
    %662 = vmatpush.msra.mxu0 %v609
    %663 = vmatpush.msra.mxu0 %v608
    %664 = vmatmul.f32.gmra.mxu0 %v591
    %v665 = vpop.f32.mrf.mxu0
    %v666 = vadd.f32 %v646, %v665
    %667 = vdwg.mxu0
    %v668 = vmax.f32 %v666, 0.0
    %v669 = vld [vmem:[#allocation14] sm:$0xff]
    %v670 = vld [vmem:[#allocation14 + $0x8] sm:$0xff]
    %v671 = vld [vmem:[#allocation14 + $0x10] sm:$0xff]
    %v672 = vld [vmem:[#allocation14 + $0x18] sm:$0xff]
    %v673 = vld [vmem:[#allocation14 + $0x20] sm:$0xff]
    %v674 = vld [vmem:[#allocation14 + $0x28] sm:$0xff]
    %v675 = vld [vmem:[#allocation14 + $0x30] sm:$0xff]
    %v676 = vld [vmem:[#allocation14 + $0x38] sm:$0xff]
    %v677 = vld [vmem:[#allocation14 + $0x40] sm:$0xff]
    %v678 = vld [vmem:[#allocation14 + $0x48] sm:$0xff]
    %v679 = vld [vmem:[#allocation14 + $0x50] sm:$0xff]
    %v680 = vld [vmem:[#allocation14 + $0x58] sm:$0xff]
    %v681 = vld [vmem:[#allocation14 + $0x60] sm:$0xff]
    %v682 = vld [vmem:[#allocation14 + $0x68] sm:$0xff]
    %v683 = vld [vmem:[#allocation14 + $0x70] sm:$0xff]
    %v684 = vld [vmem:[#allocation14 + $0x78] sm:$0xff]
    %v685 = vld [vmem:[%s12] sm:$0x1]
    %v687 = vperm.slane %v685, 0
    %689 = vmatpush.msra.mxu0 %v684
    %690 = vmatpush.msra.mxu0 %v683
    %691 = vmatpush.msra.mxu0 %v682
    %692 = vmatpush.msra.mxu0 %v681
    %693 = vmatpush.msra.mxu0 %v680
    %694 = vmatpush.msra.mxu0 %v679
    %695 = vmatpush.msra.mxu0 %v678
    %696 = vmatpush.msra.mxu0 %v677
    %697 = vmatpush.msra.mxu0 %v676
    %698 = vmatpush.msra.mxu0 %v675
    %699 = vmatpush.msra.mxu0 %v674
    %700 = vmatpush.msra.mxu0 %v673
    %701 = vmatpush.msra.mxu0 %v672
    %702 = vmatpush.msra.mxu0 %v671
    %703 = vmatpush.msra.mxu0 %v670
    %704 = vmatpush.msra.mxu0 %v669
    %705 = vmatmul.f32.gmra.mxu0 %v668
    %v706 = vpop.f32.mrf.mxu0
    %v707 = vadd.f32 %v687, %v706
    %708 = vdwg.mxu0
    %709 = vst [vmem:[#allocation16] sm:$0xff] %v707
    // Predicated region
    $region86: #{tpu_custom_call.1} parent=1 // pred_check
      _
    $region87: #{tpu_custom_call.1} parent=1 // pred_check_branch
      %711 = sbr.rel (0) target = $region89
    $region88: #{tpu_custom_call.1} parent=1 // pred_region
      %713 = vsyncadd [#allocation4], 0
      %s715 = sshll.u32 [#allocation16], 4
      %s716 = int_to_ptr.vmem [resolvable:$true] %s715
      %s717 = sshll.u32 %s13, 4
      %s718 = int_to_ptr.hbm [resolvable:$true] %s717
      %720 = dma.vmem_to_hbm [thread:$0]  %s716, 128, %s718, [#allocation4]
    $region89: #{tpu_custom_call.1} parent=1 // pred_fallthru
      _
    // Predicated region
    $region90: #{tpu_custom_call.1} parent=1 // pred_check
      _
    $region91: #{tpu_custom_call.1} parent=1 // pred_check_branch
      %722 = sbr.rel (0) target = $region93
    $region92: #{tpu_custom_call.1} parent=1 // pred_region
      %724 = dma.done [#allocation4], 128
    $region93: #{tpu_custom_call.1} parent=1 // pred_fallthru
      _
    %725 = vsyncpa [#allocation3], 1
    %726 = vsyncpa [#allocation6], 1
    %727 = vsyncpa [#allocation9], 1
    %728 = vsyncpa [#allocation12], 1
    %729 = vsyncpa [#allocation15], 1
    %730 = vsyncpa [#allocation4], 1

</llo_original>
